<compile_context>
chip_gen: v7x
topology: tpu7x:2x2x1
jax: 0.10.0
libtpu: 0.0.40
codegen_flags: <defaults>
</compile_context>

<pallas_src>
import functools
import math

import numpy as np

import jax
import jax.numpy as jnp
from jax import lax
from jax.experimental import pallas as pl
from jax.experimental.pallas import tpu as pltpu


def _round_up(x, m):
    return (x + m - 1) // m * m


@functools.lru_cache(maxsize=None)
def _band_dft_matrix(T, fs, low_cutoff, high_cutoff, spectral_dtype_name):
    """Band-selected, forward-normed DFT matrix, packed cos|sin, shape (T, F_pack).

    Columns [0:nb] hold cos(2*pi*n*k/T)/T and columns [nb:2nb] hold sin(2*pi*n*k/T)/T
    for the in-band bins k only; remaining pad columns are exactly zero, so
    sum(spec**2, -1) is exactly the masked band energy (mask baked into the weights).
    """
    F = T // 2 + 1
    freqs = np.arange(F) * (float(fs) / T)          # == torch.fft.rfftfreq(T, d=1/fs)
    band = np.nonzero((freqs >= low_cutoff) & (freqs <= high_cutoff))[0]
    nb = int(band.shape[0])
    f_pack = max(128, _round_up(max(2 * nb, 1), 128))   # lane-dense packed width

    w = np.zeros((T, f_pack), dtype=np.float32)
    if nb:
        n = np.arange(T, dtype=np.float64)[:, None]            # (T, 1)
        k = band.astype(np.float64)[None, :]                    # (1, nb)
        ang = 2.0 * np.pi * n * k / T
        w[:, :nb] = (np.cos(ang) / T).astype(np.float32)
        w[:, nb:2 * nb] = (np.sin(ang) / T).astype(np.float32)
    return jnp.asarray(w, dtype=jnp.dtype(spectral_dtype_name)), f_pack


def _hybrid_loss_kernel(s_ref, w_ref, out_ref, *, alpha, beta, n_time, batch, tile_b):
    i = pl.program_id(0)

    s = s_ref[...]                                    # (2*tb, T), native dtype (pred|gt stacked)
    w = w_ref[...]                                    # (T, F_pack) bf16/f32, resident

    # ---- band-limited spectral energy: one fused MXU matmul (f32 accumulate) ----
    spec = jnp.dot(s.astype(w.dtype), w, preferred_element_type=jnp.float32)  # (2tb, F_pack)
    energy = jnp.sum(spec * spec, axis=-1, keepdims=True)   # (2tb, 1); pad cols are exactly 0
    e_pred = energy[:tile_b]
    e_gt = energy[tile_b:]
    # zero-padded batch rows give |0 - 0| = 0, so no validity mask needed here
    band_sum = jnp.sum(jnp.abs(e_pred - e_gt))        # scalar: sum_i |dE_i| over this tile

    # ---- negative-Pearson moments on the VPU, full f32 ----
    s32 = s.astype(jnp.float32)
    p = s32[:tile_b]                                  # (tb, T)
    g = s32[tile_b:]
    sum_x = jnp.sum(p, axis=-1, keepdims=True)        # (tb, 1)
    sum_y = jnp.sum(g, axis=-1, keepdims=True)
    sum_xy = jnp.sum(p * g, axis=-1, keepdims=True)
    sum_x2 = jnp.sum(p * p, axis=-1, keepdims=True)
    sum_y2 = jnp.sum(g * g, axis=-1, keepdims=True)

    n = jnp.float32(n_time)
    numerator = n * sum_xy - sum_x * sum_y
    denominator = jnp.sqrt((n * sum_x2 - sum_x * sum_x) *
                           (n * sum_y2 - sum_y * sum_y) + 1e-8)
    pearson = numerator / (denominator + 1e-8)        # (tb, 1)

    # mask out zero-padded batch rows (their r == 0 would spuriously add +1)
    row_idx = i * tile_b + lax.broadcasted_iota(jnp.int32, (tile_b, 1), 0)
    valid = (row_idx < batch).astype(jnp.float32)
    pear_sum = jnp.sum((1.0 - pearson) * valid)       # scalar

    contrib = jnp.float32(alpha) * band_sum + jnp.float32(beta) * pear_sum
    out_ref[...] = jnp.broadcast_to(contrib, out_ref.shape)   # per-tile partial (1,1,128)


def hybrid_loss(pred, gt, *, fs, alpha=1.0, beta=0.5,
                low_cutoff=0.7, high_cutoff=2.7, spectral_dtype=jnp.bfloat16):
    """pred, gt: (B, T).  Returns scalar loss (float32), matching HybridLoss.forward."""
    B, T = pred.shape
    assert gt.shape == (B, T)

    w, f_pack = _band_dft_matrix(int(T), float(fs), float(low_cutoff),
                                 float(high_cutoff), jnp.dtype(spectral_dtype).name)

    # Sublane-aligned batch tile; M = 2*tile_b = 256 fills the 256-wide MXU on v6e/v7x.
    tile_b = min(_round_up(B, 8), 128)
    b_pad = _round_up(B, tile_b)
    num_tiles = b_pad // tile_b

    if b_pad != B:
        padding = ((0, b_pad - B), (0, 0))
        pred = jnp.pad(pred, padding)
        gt = jnp.pad(gt, padding)

    # Pre-stack pred/gt per batch tile (single XLA op fused with the pad); kernel sees
    # one (2*tile_b, T) block per grid step and never concatenates in VMEM.
    s = jnp.concatenate([pred.reshape(num_tiles, tile_b, T),
                         gt.reshape(num_tiles, tile_b, T)], axis=1)   # (nt, 2*tb, T)

    kernel = functools.partial(_hybrid_loss_kernel,
                               alpha=float(alpha), beta=float(beta),
                               n_time=int(T), batch=int(B), tile_b=int(tile_b))

    # VMEM budget: resident (pipeline double-buffered) DFT weights + double-buffered
    # stacked-signal tiles + in-kernel f32/bf16 copies and the spec intermediate.
    in_itemsize = jnp.dtype(s.dtype).itemsize
    w_bytes = int(w.size) * w.dtype.itemsize
    est = (2 * w_bytes
           + 2 * (2 * tile_b) * T * in_itemsize
           + (2 * tile_b) * T * (4 + 2)
           + (2 * tile_b) * f_pack * 4
           + (1 << 20))
    try:  # generation-aware clamp (v7x only has 64 MiB physical VMEM)
        cap = int(pltpu.get_tpu_info().vmem_capacity_bytes) * 3 // 4
    except Exception:
        cap = 48 * 2 ** 20
    vmem_limit = int(min(max(est, 16 * 2 ** 20), cap))

    out = pl.pallas_call(
        kernel,
        out_shape=jax.ShapeDtypeStruct((num_tiles, 1, 128), jnp.float32),
        grid=(num_tiles,),
        in_specs=[
            pl.BlockSpec((None, 2 * tile_b, T), lambda i: (i, 0, 0)),   # stacked pred|gt tile
            pl.BlockSpec((T, f_pack), lambda i: (0, 0)),                # DFT weights: resident
        ],
        out_specs=pl.BlockSpec((1, 1, 128), lambda i: (i, 0, 0)),       # per-tile partial loss
        compiler_params=pltpu.CompilerParams(
            dimension_semantics=("parallel",),
            vmem_limit_bytes=vmem_limit),
    )(s, w)

    partials = out[:, 0, 0]                           # (num_tiles,)
    return jnp.sum(partials) * jnp.float32(1.0 / B)


def hybrid_loss_ref(pred, gt, *, fs, alpha=1.0, beta=0.5, low_cutoff=0.7, high_cutoff=2.7):
    """Pure-JAX reference mirroring the PyTorch HybridLoss (for sanity checking)."""
    T = pred.shape[-1]
    pf = jnp.fft.rfft(pred, norm='forward')
    gf = jnp.fft.rfft(gt, norm='forward')
    pp = jnp.real(pf) ** 2 + jnp.imag(pf) ** 2
    gp = jnp.real(gf) ** 2 + jnp.imag(gf) ** 2
    freqs = jnp.fft.rfftfreq(T, d=1.0 / fs)
    mask = (freqs >= low_cutoff) & (freqs <= high_cutoff)
    pe = jnp.sum(jnp.where(mask, pp, 0.0), axis=-1)
    ge = jnp.sum(jnp.where(mask, gp, 0.0), axis=-1)
    band = jnp.mean(jnp.abs(pe - ge))
    n = jnp.float32(T)
    sx = pred.sum(-1); sy = gt.sum(-1)
    sxy = (pred * gt).sum(-1); sx2 = (pred * pred).sum(-1); sy2 = (gt * gt).sum(-1)
    num = n * sxy - sx * sy
    den = jnp.sqrt((n * sx2 - sx ** 2) * (n * sy2 - sy ** 2) + 1e-8)
    r = num / (den + 1e-8)
    pear = jnp.mean(1.0 - r)
    return alpha * band + beta * pear


if __name__ == "__main__":
    B, T = 4, 128
    fs = 30.0  # sampling rate (e.g. rPPG at 30 Hz)

    key = jax.random.PRNGKey(0)
    k1, k2 = jax.random.split(key)
    t = jnp.arange(T, dtype=jnp.float32) / fs
    gt = jnp.sin(2 * math.pi * 1.5 * t)[None, :] * jnp.ones((B, 1), jnp.float32)
    gt = gt + 0.05 * jax.random.normal(k1, (B, T), jnp.float32)
    pred = gt + 0.2 * jax.random.normal(k2, (B, T), jnp.float32)

    loss = hybrid_loss(pred, gt, fs=fs, alpha=1.0, beta=0.5,
                       low_cutoff=0.7, high_cutoff=2.7)
    loss = jax.block_until_ready(loss)

    ref = hybrid_loss_ref(pred, gt, fs=fs, alpha=1.0, beta=0.5,
                          low_cutoff=0.7, high_cutoff=2.7)
    ref = jax.block_until_ready(ref)
    # Loose tolerance: spectral matmul uses bf16 inputs (f32 accumulate); Pearson is full f32.
    assert abs(float(loss) - float(ref)) <= 5e-3 + 1e-1 * abs(float(ref)), (float(loss), float(ref))

    print("KERNEL_OK")
</pallas_src>

<mosaic_0001>
module attributes {stable_mosaic.version = 11 : i64} {
  func.func @_hybrid_loss_kernel(%arg0: i32, %arg1: memref<1x16x128xf32, #tpu.memory_space<vmem>>, %arg2: memref<128x128xbf16, #tpu.memory_space<vmem>>, %arg3: memref<1x1x128xf32, #tpu.memory_space<vmem>>) attributes {dimension_semantics = [#tpu.dimension_semantics<parallel>], iteration_bounds = array<i64: 1>, scalar_prefetch = 0 : i64, scratch_operands = 0 : i64, tpu.core_type = #tpu.core_type<tc>, window_params = [{transform_indices = @transform_0, window_bounds = array<i64: 1, 16, 128>}, {pipeline_mode = #tpu.pipeline_mode<synchronous>, transform_indices = @transform_1, window_bounds = array<i64: 128, 128>}, {transform_indices = @transform_2, window_bounds = array<i64: 1, 1, 128>}]} {
    %c0 = arith.constant 0 : index
    %c0_0 = arith.constant 0 : index
    %c0_1 = arith.constant 0 : index
    %0 = vector.load %arg1[%c0, %c0_0, %c0_1] : memref<1x16x128xf32, #tpu.memory_space<vmem>>, vector<1x16x128xf32>
    %1 = vector.shape_cast %0 : vector<1x16x128xf32> to vector<16x128xf32>
    %c0_2 = arith.constant 0 : index
    %c0_3 = arith.constant 0 : index
    %2 = vector.load %arg2[%c0_2, %c0_3] : memref<128x128xbf16, #tpu.memory_space<vmem>>, vector<128x128xbf16>
    %3 = arith.truncf %1 : vector<16x128xf32> to vector<16x128xbf16>
    %cst = arith.constant dense<0.000000e+00> : vector<16x128xf32>
    %4 = tpu.matmul %3, %2, %cst {dimension_numbers = #tpu.dot_dimension_numbers<[1], [0], [0], [1], [0, 0, 1, 1], [], []>} : vector<16x128xbf16>, vector<128x128xbf16>, vector<16x128xf32> -> vector<16x128xf32>
    %5 = arith.mulf %4, %4 : vector<16x128xf32>
    %cst_4 = arith.constant dense<0.000000e+00> : vector<16xf32>
    %6 = vector.multi_reduction <add>, %5, %cst_4 [1] : vector<16x128xf32> to vector<16xf32>
    %7 = vector.shape_cast %6 : vector<16xf32> to vector<16x1xf32>
    %8 = vector.extract_strided_slice %7 {offsets = [0, 0], sizes = [8, 1], strides = [1, 1]} : vector<16x1xf32> to vector<8x1xf32>
    %9 = vector.extract_strided_slice %7 {offsets = [8, 0], sizes = [8, 1], strides = [1, 1]} : vector<16x1xf32> to vector<8x1xf32>
    %10 = arith.subf %8, %9 : vector<8x1xf32>
    %11 = math.absf %10 : vector<8x1xf32>
    %12 = vector.shape_cast %11 : vector<8x1xf32> to vector<1x8x1xf32>
    %cst_5 = arith.constant dense<0.000000e+00> : vector<1xf32>
    %13 = vector.multi_reduction <add>, %12, %cst_5 [1, 2] : vector<1x8x1xf32> to vector<1xf32>
    %14 = vector.shape_cast %13 : vector<1xf32> to vector<1x1x1xf32>
    %15 = vector.extract %14[0, 0, 0] : f32 from vector<1x1x1xf32>
    %16 = vector.extract_strided_slice %1 {offsets = [0, 0], sizes = [8, 128], strides = [1, 1]} : vector<16x128xf32> to vector<8x128xf32>
    %17 = vector.extract_strided_slice %1 {offsets = [8, 0], sizes = [8, 128], strides = [1, 1]} : vector<16x128xf32> to vector<8x128xf32>
    %cst_6 = arith.constant dense<0.000000e+00> : vector<8xf32>
    %18 = vector.multi_reduction <add>, %16, %cst_6 [1] : vector<8x128xf32> to vector<8xf32>
    %19 = vector.shape_cast %18 : vector<8xf32> to vector<8x1xf32>
    %cst_7 = arith.constant dense<0.000000e+00> : vector<8xf32>
    %20 = vector.multi_reduction <add>, %17, %cst_7 [1] : vector<8x128xf32> to vector<8xf32>
    %21 = vector.shape_cast %20 : vector<8xf32> to vector<8x1xf32>
    %22 = arith.mulf %16, %17 : vector<8x128xf32>
    %cst_8 = arith.constant dense<0.000000e+00> : vector<8xf32>
    %23 = vector.multi_reduction <add>, %22, %cst_8 [1] : vector<8x128xf32> to vector<8xf32>
    %24 = vector.shape_cast %23 : vector<8xf32> to vector<8x1xf32>
    %25 = arith.mulf %16, %16 : vector<8x128xf32>
    %cst_9 = arith.constant dense<0.000000e+00> : vector<8xf32>
    %26 = vector.multi_reduction <add>, %25, %cst_9 [1] : vector<8x128xf32> to vector<8xf32>
    %27 = vector.shape_cast %26 : vector<8xf32> to vector<8x1xf32>
    %28 = arith.mulf %17, %17 : vector<8x128xf32>
    %cst_10 = arith.constant dense<0.000000e+00> : vector<8xf32>
    %29 = vector.multi_reduction <add>, %28, %cst_10 [1] : vector<8x128xf32> to vector<8xf32>
    %30 = vector.shape_cast %29 : vector<8xf32> to vector<8x1xf32>
    %cst_11 = arith.constant 1.280000e+02 : f32
    %31 = vector.broadcast %cst_11 : f32 to vector<8x1xf32>
    %32 = arith.mulf %31, %24 : vector<8x1xf32>
    %33 = arith.mulf %19, %21 : vector<8x1xf32>
    %34 = arith.subf %32, %33 : vector<8x1xf32>
    %cst_12 = arith.constant 1.280000e+02 : f32
    %35 = vector.broadcast %cst_12 : f32 to vector<8x1xf32>
    %36 = arith.mulf %35, %27 : vector<8x1xf32>
    %37 = arith.mulf %19, %19 : vector<8x1xf32>
    %38 = arith.subf %36, %37 : vector<8x1xf32>
    %cst_13 = arith.constant 1.280000e+02 : f32
    %39 = vector.broadcast %cst_13 : f32 to vector<8x1xf32>
    %40 = arith.mulf %39, %30 : vector<8x1xf32>
    %41 = arith.mulf %21, %21 : vector<8x1xf32>
    %42 = arith.subf %40, %41 : vector<8x1xf32>
    %43 = arith.mulf %38, %42 : vector<8x1xf32>
    %cst_14 = arith.constant 9.99999993E-9 : f32
    %44 = vector.broadcast %cst_14 : f32 to vector<8x1xf32>
    %45 = arith.addf %43, %44 : vector<8x1xf32>
    %46 = math.sqrt %45 : vector<8x1xf32>
    %cst_15 = arith.constant 9.99999993E-9 : f32
    %47 = vector.broadcast %cst_15 : f32 to vector<8x1xf32>
    %48 = arith.addf %46, %47 : vector<8x1xf32>
    %49 = arith.divf %34, %48 : vector<8x1xf32>
    %c8_i32 = arith.constant 8 : i32
    %50 = arith.muli %arg0, %c8_i32 : i32
    %51 = tpu.iota {dimensions = array<i32: 0>} : vector<8x1xi32>
    %52 = vector.broadcast %50 : i32 to vector<8x1xi32>
    %53 = arith.addi %52, %51 : vector<8x1xi32>
    %c4_i32 = arith.constant 4 : i32
    %54 = vector.broadcast %c4_i32 : i32 to vector<8x1xi32>
    %55 = arith.cmpi slt, %53, %54 : vector<8x1xi32>
    %56 = arith.extui %55 : vector<8x1xi1> to vector<8x1xi32>
    %57 = arith.sitofp %56 : vector<8x1xi32> to vector<8x1xf32>
    %cst_16 = arith.constant 1.000000e+00 : f32
    %58 = vector.broadcast %cst_16 : f32 to vector<8x1xf32>
    %59 = arith.subf %58, %49 : vector<8x1xf32>
    %60 = arith.mulf %59, %57 : vector<8x1xf32>
    %61 = vector.shape_cast %60 : vector<8x1xf32> to vector<1x8x1xf32>
    %cst_17 = arith.constant dense<0.000000e+00> : vector<1xf32>
    %62 = vector.multi_reduction <add>, %61, %cst_17 [1, 2] : vector<1x8x1xf32> to vector<1xf32>
    %63 = vector.shape_cast %62 : vector<1xf32> to vector<1x1x1xf32>
    %64 = vector.extract %63[0, 0, 0] : f32 from vector<1x1x1xf32>
    %cst_18 = arith.constant 1.000000e+00 : f32
    %65 = arith.mulf %cst_18, %15 : f32
    %cst_19 = arith.constant 5.000000e-01 : f32
    %66 = arith.mulf %cst_19, %64 : f32
    %67 = arith.addf %65, %66 : f32
    %68 = vector.broadcast %67 : f32 to vector<1x1x128xf32>
    %c0_20 = arith.constant 0 : index
    %c0_21 = arith.constant 0 : index
    %c0_22 = arith.constant 0 : index
    %69 = vector.load %arg3[%c0_20, %c0_21, %c0_22] : memref<1x1x128xf32, #tpu.memory_space<vmem>>, vector<1x1x128xf32>
    tpu.vector_store %arg3[%c0_20, %c0_21, %c0_22], %68 {strides = array<i32>} : memref<1x1x128xf32, #tpu.memory_space<vmem>>, vector<1x1x128xf32>,
    return
  }
  func.func @transform_0(%arg0: i32) -> (i32, i32, i32) {
    %c0_i32 = arith.constant 0 : i32
    %c0_i32_0 = arith.constant 0 : i32
    %c0_i32_1 = arith.constant 0 : i32
    return %arg0, %c0_i32, %c0_i32_0 : i32, i32, i32
  }
  func.func @transform_1(%arg0: i32) -> (i32, i32) {
    %c0_i32 = arith.constant 0 : i32
    %c0_i32_0 = arith.constant 0 : i32
    %c0_i32_1 = arith.constant 0 : i32
    return %c0_i32, %c0_i32_0 : i32, i32
  }
  func.func @transform_2(%arg0: i32) -> (i32, i32, i32) {
    %c0_i32 = arith.constant 0 : i32
    %c0_i32_0 = arith.constant 0 : i32
    %c0_i32_1 = arith.constant 0 : i32
    return %arg0, %c0_i32, %c0_i32_0 : i32, i32, i32
  }
}

</mosaic_0001>

<llo_original>
// kernel: tpu_custom_call.1
$region0: #{tpu_custom_call.1}
  #allocation0 [shape = 'u32[]', space=smem, size = 0x4, offset = 0x4, fixed_abs, tag = 'smem constant byte address 0x4 - core index']
  #allocation1 [shape = 'u32[144,128]{1,0:T(1,128)}', space=vmem, size = 0x12000, scoped, tag = 'internal scratch']
  %s0 = inlined_call_operand.hbm [shape: f32[1,16,128], index: 0, kind: input, shape index: {}]
  %s1 = inlined_call_operand.hbm [shape: bf16[128,128], index: 1, kind: input, shape index: {}]
  %s2 = inlined_call_operand.hbm [shape: f32[1,1,128], index: 2, kind: output, shape index: {}]
  %s3 = sld [smem:[#allocation0]]
  $region26: #{tpu_custom_call.1} parent=0
    _
  %s5 = ssub.s32 1, %s3
  %s6 = scalar_select 0, %s5, %s3
  $region1: #{tpu_custom_call.1} parent=0
    #allocation2 [shape = 'u8[8192]{0}', space=vmem, size = 0x2000, scoped, tag = 'input window, operand 0, single buffered']
    #allocation3 [shape = 's32[1]{0}', space=sflag, size = 0x4, scoped, tag = 'scoped memory for tpu_custom_call.1']
    #allocation4 [shape = 's32[1]{0}', space=sflag, size = 0x4, scoped, tag = 'scoped memory for tpu_custom_call.1']
    #allocation5 [shape = 'u8[32768]{0}', space=vmem, size = 0x8000, scoped, tag = 'input window, operand 1, single buffered']
    #allocation6 [shape = 's32[1]{0}', space=sflag, size = 0x4, scoped, tag = 'scoped memory for tpu_custom_call.1']
    #allocation7 [shape = 'u8[512]{0}', space=vmem, size = 0x400, scoped, tag = 'output window, operand 0, single buffered']
    %7 = vsyncpa [#allocation3], 0
    %8 = vsyncpa [#allocation6], 0
    %9 = vsyncpa [#allocation4], 0
    // Predicated region
    $region2: #{tpu_custom_call.1} parent=1 // pred_check
      _
    $region3: #{tpu_custom_call.1} parent=1 // pred_check_branch
      %11 = sbr.rel (0) target = $region5
    $region4: #{tpu_custom_call.1} parent=1 // pred_region
      %s13 = ssub.s32 256, 256
      %14 = vsyncadd [#allocation3], %s13
      %s15 = sshll.u32 [#allocation2], 4
      %s16 = int_to_ptr.vmem [resolvable:$true] %s15
      %21 = dma.hbm_to_vmem [thread:$0]  %s0, 256, %s16, [#allocation3], 128, 128, 8
    $region5: #{tpu_custom_call.1} parent=1 // pred_fallthru
      _
    // Predicated region
    $region6: #{tpu_custom_call.1} parent=1 // pred_check
      _
    $region7: #{tpu_custom_call.1} parent=1 // pred_check_branch
      %23 = sbr.rel (0) target = $region9
    $region8: #{tpu_custom_call.1} parent=1 // pred_region
      %s25 = ssub.s32 1024, 1024
      %26 = vsyncadd [#allocation6], %s25
      %s27 = sshll.u32 [#allocation5], 4
      %s28 = int_to_ptr.vmem [resolvable:$true] %s27
      %33 = dma.hbm_to_vmem [thread:$0]  %s1, 1024, %s28, [#allocation6], 64, 64, 4
    $region9: #{tpu_custom_call.1} parent=1 // pred_fallthru
      _
    // Predicated region
    $region10: #{tpu_custom_call.1} parent=1 // pred_check
      _
    $region11: #{tpu_custom_call.1} parent=1 // pred_check_branch
      %35 = sbr.rel (0) target = $region13
    $region12: #{tpu_custom_call.1} parent=1 // pred_region
      %36 = dma.done [#allocation3], 256
    $region13: #{tpu_custom_call.1} parent=1 // pred_fallthru
      _
    // Predicated region
    $region14: #{tpu_custom_call.1} parent=1 // pred_check
      _
    $region15: #{tpu_custom_call.1} parent=1 // pred_check_branch
      %38 = sbr.rel (0) target = $region17
    $region16: #{tpu_custom_call.1} parent=1 // pred_region
      %39 = dma.done [#allocation6], 1024
    $region17: #{tpu_custom_call.1} parent=1 // pred_fallthru
      _
    %v41 = vld [vmem:[#allocation2] sm:$0xff]
    %v42 = vld [vmem:[#allocation2 + $0x8] sm:$0xff]
    %v43 = vld [vmem:[#allocation5] sm:$0xf]
    %v44 = vld [vmem:[#allocation5 + $0x4] sm:$0xf]
    %v45 = vld [vmem:[#allocation5 + $0x8] sm:$0xf]
    %v46 = vld [vmem:[#allocation5 + $0xc] sm:$0xf]
    %v47 = vld [vmem:[#allocation5 + $0x10] sm:$0xf]
    %v48 = vld [vmem:[#allocation5 + $0x14] sm:$0xf]
    %v49 = vld [vmem:[#allocation5 + $0x18] sm:$0xf]
    %v50 = vld [vmem:[#allocation5 + $0x1c] sm:$0xf]
    %v51 = vld [vmem:[#allocation5 + $0x20] sm:$0xf]
    %v52 = vld [vmem:[#allocation5 + $0x24] sm:$0xf]
    %v53 = vld [vmem:[#allocation5 + $0x28] sm:$0xf]
    %v54 = vld [vmem:[#allocation5 + $0x2c] sm:$0xf]
    %v55 = vld [vmem:[#allocation5 + $0x30] sm:$0xf]
    %v56 = vld [vmem:[#allocation5 + $0x34] sm:$0xf]
    %v57 = vld [vmem:[#allocation5 + $0x38] sm:$0xf]
    %v58 = vld [vmem:[#allocation5 + $0x3c] sm:$0xf]
    %v59 = vpack.c.bf16 %v42, %v41
    %v76 = vunpack.c.l.b16 %v43
    %v77 = vunpack.c.l.b16 %v44
    %v78 = vunpack.c.l.b16 %v45
    %v79 = vunpack.c.l.b16 %v46
    %v80 = vunpack.c.l.b16 %v47
    %v81 = vunpack.c.l.b16 %v48
    %v82 = vunpack.c.l.b16 %v49
    %v83 = vunpack.c.l.b16 %v50
    %v84 = vunpack.c.l.b16 %v51
    %v85 = vunpack.c.l.b16 %v52
    %v86 = vunpack.c.l.b16 %v53
    %v87 = vunpack.c.l.b16 %v54
    %v88 = vunpack.c.l.b16 %v55
    %v89 = vunpack.c.l.b16 %v56
    %v90 = vunpack.c.l.b16 %v57
    %v91 = vunpack.c.l.b16 %v58
    %v92 = vpack.c.b16 %v77, %v76
    %v93 = vpack.c.b16 %v79, %v78
    %v94 = vpack.c.b16 %v81, %v80
    %v95 = vpack.c.b16 %v83, %v82
    %v96 = vpack.c.b16 %v85, %v84
    %v97 = vpack.c.b16 %v87, %v86
    %v98 = vpack.c.b16 %v89, %v88
    %v99 = vpack.c.b16 %v91, %v90
    %108 = vmatprep.subr.bf16.mxu0 0
    %109 = vmatpush1.bf16.msra.mxu0 %v92
    %110 = vmatprep.subr.bf16.mxu0 0
    %111 = vmatpush1.bf16.msra.mxu0 %v93
    %112 = vmatprep.subr.bf16.mxu0 0
    %113 = vmatpush1.bf16.msra.mxu0 %v94
    %114 = vmatprep.subr.bf16.mxu0 0
    %115 = vmatpush1.bf16.msra.mxu0 %v95
    %116 = vmatprep.subr.bf16.mxu0 0
    %117 = vmatpush1.bf16.msra.mxu0 %v96
    %118 = vmatprep.subr.bf16.mxu0 0
    %119 = vmatpush1.bf16.msra.mxu0 %v97
    %120 = vmatprep.subr.bf16.mxu0 0
    %121 = vmatpush1.bf16.msra.mxu0 %v98
    %122 = vmatprep.subr.bf16.mxu0 0
    %123 = vmatpush1.bf16.msra.mxu0 %v99
    %124 = vmatprep.subr.bf16.mxu0 0
    %125 = vmatpush1.bf16.msra.mxu0 0
    %126 = vmatprep.subr.bf16.mxu0 0
    %127 = vmatpush1.bf16.msra.mxu0 0
    %128 = vmatprep.subr.bf16.mxu0 0
    %129 = vmatpush1.bf16.msra.mxu0 0
    %130 = vmatprep.subr.bf16.mxu0 0
    %131 = vmatpush1.bf16.msra.mxu0 0
    %132 = vmatprep.subr.bf16.mxu0 0
    %133 = vmatpush1.bf16.msra.mxu0 0
    %134 = vmatprep.subr.bf16.mxu0 0
    %135 = vmatpush1.bf16.msra.mxu0 0
    %136 = vmatprep.subr.bf16.mxu0 0
    %137 = vmatpush1.bf16.msra.mxu0 0
    %138 = vmatprep.subr.bf16.mxu0 0
    %139 = vmatpush1.bf16.msra.mxu0 0
    %140 = vmatprep.mubr.bf16.mxu0 0
    %141 = vmatmul.mubr.bf16.gmra.mrb[0].mxu0 %v59
    %v142 = vpop.f32.mrb[0].mxu0
    %v143 = vadd.f32 0.0, %v142
    %v144 = vpop.f32.mrb[0].mxu0
    %v145 = vpop.f32.mrb[0].mxu0
    %v146 = vadd.f32 0.0, %v145
    %v147 = vpop.f32.mrb[0].mxu0
    %148 = vdwg.mxu0
    %v149 = vmul.f32 %v143, %v143
    %v150 = vmul.f32 %v146, %v146
    %151 = vadd.xlane.f32.xlu0 %v149
    %v152 = vpop.xlane.xlu0 %151
    %153 = vadd.xlane.f32.xlu0 %v150
    %v154 = vpop.xlane.xlu0 %153
    %v155 = vsub.f32 %v152, %v154
    %v156 = vand.u32 2147483647, %v155
    %vm157 = vcmask 7168
    %v158 = vsel %vm157, %v156, 0.0
    %159 = vadd.xlane.f32.xlu0 %v158
    %v160 = vpop.xlane.xlu0 %159
    %v161 = vrot.slane %v160, 4
    %v162 = vadd.f32 %v160, %v161
    %v163 = vrot.slane %v162, 2
    %v164 = vadd.f32 %v162, %v163
    %v165 = vrot.slane %v164, 1
    %v166 = vadd.f32 %v164, %v165
    %s167 = vtos %v166
    %168 = vadd.xlane.f32.xlu0 %v41
    %v169 = vpop.xlane.xlu0 %168
    %170 = vadd.xlane.f32.xlu0 %v42
    %v171 = vpop.xlane.xlu0 %170
    %v172 = vmul.f32 %v41, %v42
    %173 = vadd.xlane.f32.xlu0 %v172
    %v174 = vpop.xlane.xlu0 %173
    %v175 = vmul.f32 %v41, %v41
    %176 = vadd.xlane.f32.xlu0 %v175
    %v177 = vpop.xlane.xlu0 %176
    %v178 = vmul.f32 %v42, %v42
    %179 = vadd.xlane.f32.xlu0 %v178
    %v180 = vpop.xlane.xlu0 %179
    %v181 = vmul.f32 %v174, 128.0
    %v182 = vmul.f32 %v169, %v171
    %v183 = vsub.f32 %v181, %v182
    %v184 = vmul.f32 %v177, 128.0
    %v185 = vmul.f32 %v169, %v169
    %v186 = vsub.f32 %v184, %v185
    %v187 = vmul.f32 %v180, 128.0
    %v188 = vmul.f32 %v171, %v171
    %v189 = vsub.f32 %v187, %v188
    %v190 = vmul.f32 %v186, %v189
    %v191 = vadd.f32 %v190, 1e-08
    %v192 = vrsqrt.pop %v191
    %v193 = vmul.f32 %v191, %v192
    %vm194 = vcmp.eq.f32.partialorder %v191, inf
    %v195 = vsel %vm194, %v191, %v193
    %vm196 = vcmp.eq.f32.partialorder %v191, 0.0
    %v197 = vand.u32 %v191, 2147483648
    %v198 = vsel %vm196, %v197, %v195
    %v199 = vadd.f32 %v198, 1e-08
    %v200 = vrcp.pop %v199
    %v201 = vmul.f32 %v183, %v200
    %s202 = smul.u32 0, 8
    %v203 = vlaneseq
    %v204 = vshrl.u32 %v203, 7
    %v205 = vstv %s202
    %v206 = vadd.s32 %v205, %v204
    %vm207 = vcmp.lt.s32.totalorder %v206, 4
    %v208 = vsel %vm207, 1, 0
    %v209 = vcvt.s32.f32 %v208
    %v210 = vsub.f32 1.0, %v201
    %v211 = vmul.f32 %v210, %v209
    %v212 = vsel %vm157, %v211, 0.0
    %213 = vadd.xlane.f32.xlu0 %v212
    %v214 = vpop.xlane.xlu0 %213
    %v215 = vrot.slane %v214, 4
    %v216 = vadd.f32 %v214, %v215
    %v217 = vrot.slane %v216, 2
    %v218 = vadd.f32 %v216, %v217
    %v219 = vrot.slane %v218, 1
    %v220 = vadd.f32 %v218, %v219
    %s221 = vtos %v220
    %s222 = smul.f32 %s221, 0.5
    %s223 = sadd.f32 %s167, %s222
    %v224 = vstv %s223
    %225 = vst [vmem:[#allocation7] sm:$0x1] %v224
    // Predicated region
    $region18: #{tpu_custom_call.1} parent=1 // pred_check
      _
    $region19: #{tpu_custom_call.1} parent=1 // pred_check_branch
      %227 = sbr.rel (0) target = $region21
    $region20: #{tpu_custom_call.1} parent=1 // pred_region
      %s229 = ssub.s32 16, 16
      %230 = vsyncadd [#allocation4], %s229
      %s232 = sshll.u32 [#allocation7], 4
      %s233 = int_to_ptr.vmem [resolvable:$true] %s232
      %235 = dma.vmem_to_hbm [thread:$0]  %s233, 16, %s2, [#allocation4]
    $region21: #{tpu_custom_call.1} parent=1 // pred_fallthru
      _
    // Predicated region
    $region22: #{tpu_custom_call.1} parent=1 // pred_check
      _
    $region23: #{tpu_custom_call.1} parent=1 // pred_check_branch
      %237 = sbr.rel (0) target = $region25
    $region24: #{tpu_custom_call.1} parent=1 // pred_region
      %238 = dma.done [#allocation4], 16
    $region25: #{tpu_custom_call.1} parent=1 // pred_fallthru
      _
    %239 = vsyncpa [#allocation3], 1
    %240 = vsyncpa [#allocation6], 1
    %241 = vsyncpa [#allocation4], 1

</llo_original>
